<compile_context>
chip_gen: v7x
topology: tpu7x:2x2x1
jax: 0.10.0
libtpu: 0.0.40
codegen_flags: <defaults>
</compile_context>

<pallas_src>
import jax
import jax.numpy as jnp
from jax.experimental import pallas as pl
from jax.experimental.pallas import tpu as pltpu

# ---- model dimensions implied by the module --------------------------------
N_IN_C, H_IN, W_IN = 3, 6, 7               # Connect-4 board, 3 planes
K = 4                                       # conv kernel 4x4
C_OUT = 12
H_OUT, W_OUT = H_IN - K + 1, W_IN - K + 1   # 3, 4
N_POS = H_OUT * W_OUT                       # 12
FLAT = C_OUT * N_POS                        # 144
HID = 128
N_ACT = 7
D_IN = N_IN_C * H_IN * W_IN                 # 126 raw board features


def _round_up(n, m):
    return (n + m - 1) // m * m


# ---- Pallas kernel: 4 matmuls + biases + ReLU + sigmoid ---------------------
def conv_net_kernel(x_ref, wc_ref, bc_ref, w1_ref, b1_ref, w2_ref, b2_ref,
                    w3_ref, b3_ref, o_ref):
    dt = wc_ref.dtype                                        # MXU operand dtype (bf16)
    x = x_ref[...].astype(dt)                                # (TM, 126) f32 -> bf16 in-kernel
    # conv-as-dense-matmul on the raw board + bias + ReLU    -> (TM, 144) f32
    h = jnp.dot(x, wc_ref[...], preferred_element_type=jnp.float32) + bc_ref[...]
    h = jnp.maximum(h, 0.0)
    # fc1 + ReLU                                             -> (TM, 128) f32
    h = jnp.dot(h.astype(dt), w1_ref[...], preferred_element_type=jnp.float32) + b1_ref[...]
    h = jnp.maximum(h, 0.0)
    # fc2 + ReLU                                             -> (TM, 128) f32
    h = jnp.dot(h.astype(dt), w2_ref[...], preferred_element_type=jnp.float32) + b2_ref[...]
    h = jnp.maximum(h, 0.0)
    # fc3 + sigmoid                                          -> (TM, 7)   f32
    z = jnp.dot(h.astype(dt), w3_ref[...], preferred_element_type=jnp.float32) + b3_ref[...]
    o_ref[...] = pl.reciprocal(1.0 + jnp.exp(-z), approx=True)


# ---- one-time parameter prep ------------------------------------------------
def conv_as_dense(wc, bc):
    """Fold Conv2d(3->12,4x4,valid) + flatten(start_dim=1) into a dense matrix.

    Returns W:(126,144) and bias:(144,) such that
    flatten(conv(x)+b) == x.reshape(N,126) @ W + bias, with column order
    c*12 + (oh*4+ow)  (PyTorch flatten order)."""
    eye = jnp.eye(D_IN, dtype=jnp.float32).reshape(D_IN, N_IN_C, H_IN, W_IN)
    cols = jax.lax.conv_general_dilated(
        eye, wc, window_strides=(1, 1), padding="VALID",
        dimension_numbers=("NCHW", "OIHW", "NCHW"))           # (126, 12, 3, 4)
    W = cols.reshape(D_IN, FLAT)                              # row=board idx, col=c*12+p
    bias = jnp.repeat(bc, N_POS)                              # index c*12+p -> bc[c]
    return W, bias


def prepare_params(params, mxu_dtype=jnp.bfloat16):
    """Hoist every reshape/transpose/expansion out of the per-call path."""
    wc, bc, w1, b1, w2, b2, w3, b3 = params
    wc_big, bc_big = conv_as_dense(wc, bc)
    return dict(
        wc=wc_big.astype(mxu_dtype),                          # (126, 144)
        bc=bc_big.reshape(1, FLAT).astype(jnp.float32),
        w1=w1.T.astype(mxu_dtype), b1=b1.reshape(1, HID).astype(jnp.float32),
        w2=w2.T.astype(mxu_dtype), b2=b2.reshape(1, HID).astype(jnp.float32),
        w3=w3.T.astype(mxu_dtype), b3=b3.reshape(1, N_ACT).astype(jnp.float32),
    )


# ---- forward: batch-gridded pallas_call -------------------------------------
def conv_net_forward(x, prepped, *, block_rows=4096):
    n = x.shape[0]
    xf = x.reshape(n, D_IN)                          # no-copy view of NCHW, stays f32

    # Tile size: big enough to amortize per-step overhead, but split the batch
    # into >=2 tiles when possible so v7x's two TensorCores both get work.
    half = _round_up(pl.cdiv(n, 2), 8)
    tm = max(8, min(block_rows, half))
    n_pad = _round_up(n, tm)
    if n_pad != n:
        xf = jnp.pad(xf, ((0, n_pad - n), (0, 0)))   # batch rows only (cheap/rare)
    n_steps = n_pad // tm

    def resident(shape):                             # weights/biases stay in VMEM
        return pl.BlockSpec(shape, lambda i: (0, 0))

    weight_bytes = (D_IN * FLAT + FLAT * HID + HID * HID + HID * N_ACT) * 2 \
                 + (FLAT + 2 * HID + N_ACT) * 4
    cost = pl.CostEstimate(
        flops=2 * n_pad * (D_IN * FLAT + FLAT * HID + HID * HID + HID * N_ACT),
        transcendentals=n_pad * N_ACT,
        bytes_accessed=n_pad * (D_IN * 4 + N_ACT * 4) + weight_bytes,
    )

    out = pl.pallas_call(
        conv_net_kernel,
        out_shape=jax.ShapeDtypeStruct((n_pad, N_ACT), jnp.float32),
        grid=(n_steps,),
        in_specs=[
            pl.BlockSpec((tm, D_IN), lambda i: (i, 0)),       # streamed raw-board tile
            resident((D_IN, FLAT)),  resident((1, FLAT)),
            resident((FLAT, HID)),   resident((1, HID)),
            resident((HID, HID)),    resident((1, HID)),
            resident((HID, N_ACT)),  resident((1, N_ACT)),
        ],
        out_specs=pl.BlockSpec((tm, N_ACT), lambda i: (i, 0)),
        compiler_params=pltpu.CompilerParams(
            dimension_semantics=("parallel",),
            vmem_limit_bytes=32 * 1024 * 1024),
        cost_estimate=cost,
    )(xf, prepped["wc"], prepped["bc"], prepped["w1"], prepped["b1"],
      prepped["w2"], prepped["b2"], prepped["w3"], prepped["b3"])
    return out[:n]


# ---- parameter init (PyTorch layout: Linear weights are (out, in)) ----------
def init_params(key):
    ks = jax.random.split(key, 8)
    s = 0.1
    wc = s * jax.random.normal(ks[0], (C_OUT, N_IN_C, K, K), jnp.float32)
    bc = s * jax.random.normal(ks[1], (C_OUT,), jnp.float32)
    w1 = s * jax.random.normal(ks[2], (HID, FLAT), jnp.float32)
    b1 = s * jax.random.normal(ks[3], (HID,), jnp.float32)
    w2 = s * jax.random.normal(ks[4], (HID, HID), jnp.float32)
    b2 = s * jax.random.normal(ks[5], (HID,), jnp.float32)
    w3 = s * jax.random.normal(ks[6], (N_ACT, HID), jnp.float32)
    b3 = s * jax.random.normal(ks[7], (N_ACT,), jnp.float32)
    return wc, bc, w1, b1, w2, b2, w3, b3


# ---- references -------------------------------------------------------------
def conv_net_reference_f32(x, params):
    """Exact f32 replica of the PyTorch module."""
    wc, bc, w1, b1, w2, b2, w3, b3 = params
    conv = jax.lax.conv_general_dilated(
        x, wc, window_strides=(1, 1), padding="VALID",
        dimension_numbers=("NCHW", "OIHW", "NCHW"))
    conv = conv + bc[None, :, None, None]
    h = jnp.maximum(conv.reshape(x.shape[0], -1), 0.0)
    h = jnp.maximum(h @ w1.T + b1, 0.0)
    h = jnp.maximum(h @ w2.T + b2, 0.0)
    return jax.nn.sigmoid(h @ w3.T + b3)


def conv_net_reference_mirror(x, prepped):
    """Pure-JAX mirror of the kernel's bf16-MXU / f32-accumulate numerics."""
    n = x.shape[0]
    dt = prepped["wc"].dtype
    xf = x.reshape(n, D_IN).astype(dt)
    f32 = jnp.float32
    h = jnp.dot(xf, prepped["wc"], preferred_element_type=f32) + prepped["bc"]
    h = jnp.maximum(h, 0.0)
    h = jnp.dot(h.astype(dt), prepped["w1"], preferred_element_type=f32) + prepped["b1"]
    h = jnp.maximum(h, 0.0)
    h = jnp.dot(h.astype(dt), prepped["w2"], preferred_element_type=f32) + prepped["b2"]
    h = jnp.maximum(h, 0.0)
    z = jnp.dot(h.astype(dt), prepped["w3"], preferred_element_type=f32) + prepped["b3"]
    return jax.nn.sigmoid(z)


if __name__ == "__main__":
    key = jax.random.PRNGKey(0)
    k_x, k_x2, k_p = jax.random.split(key, 3)
    params = init_params(k_p)
    prepped = prepare_params(params)            # one-time prep (bf16 MXU operands)

    # Small batch (single tile path).
    x = jax.random.normal(k_x, (2, N_IN_C, H_IN, W_IN), jnp.float32)   # (2,3,6,7)
    out = jax.block_until_ready(conv_net_forward(x, prepped))
    assert out.shape == (2, N_ACT)

    ref_mirror = conv_net_reference_mirror(x, prepped)
    assert jnp.allclose(out, ref_mirror, atol=5e-3, rtol=0), (out, ref_mirror)
    ref_exact = conv_net_reference_f32(x, params)
    assert jnp.allclose(out, ref_exact, atol=5e-2, rtol=0), (out, ref_exact)

    # Awkward batch (exercises batch padding + 2 grid steps, the v7x path).
    x2 = jax.random.normal(k_x2, (37, N_IN_C, H_IN, W_IN), jnp.float32)
    out2 = jax.block_until_ready(conv_net_forward(x2, prepped))
    assert out2.shape == (37, N_ACT)
    ref2 = conv_net_reference_mirror(x2, prepped)
    assert jnp.allclose(out2, ref2, atol=5e-3, rtol=0)

    print("KERNEL_OK")
</pallas_src>

<mosaic_0001>
module attributes {stable_mosaic.version = 11 : i64} {
  func.func @conv_net_kernel(%arg0: i32, %arg1: memref<8x126xf32, #tpu.memory_space<vmem>>, %arg2: memref<126x144xbf16, #tpu.memory_space<vmem>>, %arg3: memref<1x144xf32, #tpu.memory_space<vmem>>, %arg4: memref<144x128xbf16, #tpu.memory_space<vmem>>, %arg5: memref<1x128xf32, #tpu.memory_space<vmem>>, %arg6: memref<128x128xbf16, #tpu.memory_space<vmem>>, %arg7: memref<1x128xf32, #tpu.memory_space<vmem>>, %arg8: memref<128x7xbf16, #tpu.memory_space<vmem>>, %arg9: memref<1x7xf32, #tpu.memory_space<vmem>>, %arg10: memref<8x7xf32, #tpu.memory_space<vmem>>) attributes {dimension_semantics = [#tpu.dimension_semantics<parallel>], iteration_bounds = array<i64: 1>, scalar_prefetch = 0 : i64, scratch_operands = 0 : i64, tpu.core_type = #tpu.core_type<tc>, window_params = [{transform_indices = @transform_0, window_bounds = array<i64: 8, 126>}, {pipeline_mode = #tpu.pipeline_mode<synchronous>, transform_indices = @transform_1, window_bounds = array<i64: 126, 144>}, {pipeline_mode = #tpu.pipeline_mode<synchronous>, transform_indices = @transform_2, window_bounds = array<i64: 1, 144>}, {pipeline_mode = #tpu.pipeline_mode<synchronous>, transform_indices = @transform_3, window_bounds = array<i64: 144, 128>}, {pipeline_mode = #tpu.pipeline_mode<synchronous>, transform_indices = @transform_4, window_bounds = array<i64: 1, 128>}, {pipeline_mode = #tpu.pipeline_mode<synchronous>, transform_indices = @transform_5, window_bounds = array<i64: 128, 128>}, {pipeline_mode = #tpu.pipeline_mode<synchronous>, transform_indices = @transform_6, window_bounds = array<i64: 1, 128>}, {pipeline_mode = #tpu.pipeline_mode<synchronous>, transform_indices = @transform_7, window_bounds = array<i64: 128, 7>}, {pipeline_mode = #tpu.pipeline_mode<synchronous>, transform_indices = @transform_8, window_bounds = array<i64: 1, 7>}, {transform_indices = @transform_9, window_bounds = array<i64: 8, 7>}]} {
    %c0 = arith.constant 0 : index
    %c0_0 = arith.constant 0 : index
    %0 = vector.load %arg1[%c0, %c0_0] : memref<8x126xf32, #tpu.memory_space<vmem>>, vector<8x126xf32>
    %1 = arith.truncf %0 : vector<8x126xf32> to vector<8x126xbf16>
    %c0_1 = arith.constant 0 : index
    %c0_2 = arith.constant 0 : index
    %2 = vector.load %arg2[%c0_1, %c0_2] : memref<126x144xbf16, #tpu.memory_space<vmem>>, vector<126x144xbf16>
    %cst = arith.constant dense<0.000000e+00> : vector<8x144xf32>
    %3 = tpu.matmul %1, %2, %cst {dimension_numbers = #tpu.dot_dimension_numbers<[1], [0], [0], [1], [0, 0, 1, 1], [], []>} : vector<8x126xbf16>, vector<126x144xbf16>, vector<8x144xf32> -> vector<8x144xf32>
    %c0_3 = arith.constant 0 : index
    %c0_4 = arith.constant 0 : index
    %4 = vector.load %arg3[%c0_3, %c0_4] : memref<1x144xf32, #tpu.memory_space<vmem>>, vector<1x144xf32>
    %5 = vector.broadcast %4 : vector<1x144xf32> to vector<8x144xf32>
    %6 = arith.addf %3, %5 : vector<8x144xf32>
    %cst_5 = arith.constant 0.000000e+00 : f32
    %7 = vector.broadcast %cst_5 : f32 to vector<8x144xf32>
    %8 = arith.maximumf %6, %7 : vector<8x144xf32>
    %9 = arith.truncf %8 : vector<8x144xf32> to vector<8x144xbf16>
    %c0_6 = arith.constant 0 : index
    %c0_7 = arith.constant 0 : index
    %10 = vector.load %arg4[%c0_6, %c0_7] : memref<144x128xbf16, #tpu.memory_space<vmem>>, vector<144x128xbf16>
    %cst_8 = arith.constant dense<0.000000e+00> : vector<8x128xf32>
    %11 = tpu.matmul %9, %10, %cst_8 {dimension_numbers = #tpu.dot_dimension_numbers<[1], [0], [0], [1], [0, 0, 1, 1], [], []>} : vector<8x144xbf16>, vector<144x128xbf16>, vector<8x128xf32> -> vector<8x128xf32>
    %c0_9 = arith.constant 0 : index
    %c0_10 = arith.constant 0 : index
    %12 = vector.load %arg5[%c0_9, %c0_10] : memref<1x128xf32, #tpu.memory_space<vmem>>, vector<1x128xf32>
    %13 = vector.broadcast %12 : vector<1x128xf32> to vector<8x128xf32>
    %14 = arith.addf %11, %13 : vector<8x128xf32>
    %cst_11 = arith.constant 0.000000e+00 : f32
    %15 = vector.broadcast %cst_11 : f32 to vector<8x128xf32>
    %16 = arith.maximumf %14, %15 : vector<8x128xf32>
    %17 = arith.truncf %16 : vector<8x128xf32> to vector<8x128xbf16>
    %c0_12 = arith.constant 0 : index
    %c0_13 = arith.constant 0 : index
    %18 = vector.load %arg6[%c0_12, %c0_13] : memref<128x128xbf16, #tpu.memory_space<vmem>>, vector<128x128xbf16>
    %cst_14 = arith.constant dense<0.000000e+00> : vector<8x128xf32>
    %19 = tpu.matmul %17, %18, %cst_14 {dimension_numbers = #tpu.dot_dimension_numbers<[1], [0], [0], [1], [0, 0, 1, 1], [], []>} : vector<8x128xbf16>, vector<128x128xbf16>, vector<8x128xf32> -> vector<8x128xf32>
    %c0_15 = arith.constant 0 : index
    %c0_16 = arith.constant 0 : index
    %20 = vector.load %arg7[%c0_15, %c0_16] : memref<1x128xf32, #tpu.memory_space<vmem>>, vector<1x128xf32>
    %21 = vector.broadcast %20 : vector<1x128xf32> to vector<8x128xf32>
    %22 = arith.addf %19, %21 : vector<8x128xf32>
    %cst_17 = arith.constant 0.000000e+00 : f32
    %23 = vector.broadcast %cst_17 : f32 to vector<8x128xf32>
    %24 = arith.maximumf %22, %23 : vector<8x128xf32>
    %25 = arith.truncf %24 : vector<8x128xf32> to vector<8x128xbf16>
    %c0_18 = arith.constant 0 : index
    %c0_19 = arith.constant 0 : index
    %26 = vector.load %arg8[%c0_18, %c0_19] : memref<128x7xbf16, #tpu.memory_space<vmem>>, vector<128x7xbf16>
    %cst_20 = arith.constant dense<0.000000e+00> : vector<8x7xf32>
    %27 = tpu.matmul %25, %26, %cst_20 {dimension_numbers = #tpu.dot_dimension_numbers<[1], [0], [0], [1], [0, 0, 1, 1], [], []>} : vector<8x128xbf16>, vector<128x7xbf16>, vector<8x7xf32> -> vector<8x7xf32>
    %c0_21 = arith.constant 0 : index
    %c0_22 = arith.constant 0 : index
    %28 = vector.load %arg9[%c0_21, %c0_22] : memref<1x7xf32, #tpu.memory_space<vmem>>, vector<1x7xf32>
    %29 = vector.broadcast %28 : vector<1x7xf32> to vector<8x7xf32>
    %30 = arith.addf %27, %29 : vector<8x7xf32>
    %cst_23 = arith.constant 0.000000e+00 : f32
    %31 = vector.broadcast %cst_23 : f32 to vector<8x7xf32>
    %32 = arith.subf %31, %30 : vector<8x7xf32>
    %33 = math.exp %32 : vector<8x7xf32>
    %cst_24 = arith.constant 1.000000e+00 : f32
    %34 = vector.broadcast %cst_24 : f32 to vector<8x7xf32>
    %35 = arith.addf %34, %33 : vector<8x7xf32>
    %36 = tpu.reciprocal %35 {approx = true} : vector<8x7xf32> -> vector<8x7xf32>
    %c0_25 = arith.constant 0 : index
    %c0_26 = arith.constant 0 : index
    %37 = vector.load %arg10[%c0_25, %c0_26] : memref<8x7xf32, #tpu.memory_space<vmem>>, vector<8x7xf32>
    tpu.vector_store %arg10[%c0_25, %c0_26], %36 {strides = array<i32>} : memref<8x7xf32, #tpu.memory_space<vmem>>, vector<8x7xf32>,
    return
  }
  func.func @transform_0(%arg0: i32) -> (i32, i32) {
    %c0_i32 = arith.constant 0 : i32
    %c0_i32_0 = arith.constant 0 : i32
    return %arg0, %c0_i32 : i32, i32
  }
  func.func @transform_1(%arg0: i32) -> (i32, i32) {
    %c0_i32 = arith.constant 0 : i32
    %c0_i32_0 = arith.constant 0 : i32
    %c0_i32_1 = arith.constant 0 : i32
    return %c0_i32, %c0_i32_0 : i32, i32
  }
  func.func @transform_2(%arg0: i32) -> (i32, i32) {
    %c0_i32 = arith.constant 0 : i32
    %c0_i32_0 = arith.constant 0 : i32
    %c0_i32_1 = arith.constant 0 : i32
    return %c0_i32, %c0_i32_0 : i32, i32
  }
  func.func @transform_3(%arg0: i32) -> (i32, i32) {
    %c0_i32 = arith.constant 0 : i32
    %c0_i32_0 = arith.constant 0 : i32
    %c0_i32_1 = arith.constant 0 : i32
    return %c0_i32, %c0_i32_0 : i32, i32
  }
  func.func @transform_4(%arg0: i32) -> (i32, i32) {
    %c0_i32 = arith.constant 0 : i32
    %c0_i32_0 = arith.constant 0 : i32
    %c0_i32_1 = arith.constant 0 : i32
    return %c0_i32, %c0_i32_0 : i32, i32
  }
  func.func @transform_5(%arg0: i32) -> (i32, i32) {
    %c0_i32 = arith.constant 0 : i32
    %c0_i32_0 = arith.constant 0 : i32
    %c0_i32_1 = arith.constant 0 : i32
    return %c0_i32, %c0_i32_0 : i32, i32
  }
  func.func @transform_6(%arg0: i32) -> (i32, i32) {
    %c0_i32 = arith.constant 0 : i32
    %c0_i32_0 = arith.constant 0 : i32
    %c0_i32_1 = arith.constant 0 : i32
    return %c0_i32, %c0_i32_0 : i32, i32
  }
  func.func @transform_7(%arg0: i32) -> (i32, i32) {
    %c0_i32 = arith.constant 0 : i32
    %c0_i32_0 = arith.constant 0 : i32
    %c0_i32_1 = arith.constant 0 : i32
    return %c0_i32, %c0_i32_0 : i32, i32
  }
  func.func @transform_8(%arg0: i32) -> (i32, i32) {
    %c0_i32 = arith.constant 0 : i32
    %c0_i32_0 = arith.constant 0 : i32
    %c0_i32_1 = arith.constant 0 : i32
    return %c0_i32, %c0_i32_0 : i32, i32
  }
  func.func @transform_9(%arg0: i32) -> (i32, i32) {
    %c0_i32 = arith.constant 0 : i32
    %c0_i32_0 = arith.constant 0 : i32
    return %arg0, %c0_i32 : i32, i32
  }
}

</mosaic_0001>

<llo_original>
// kernel: tpu_custom_call.1
$region0: #{tpu_custom_call.1}
  #allocation0 [shape = 'u32[]', space=smem, size = 0x4, offset = 0x4, fixed_abs, tag = 'smem constant byte address 0x4 - core index']
  #allocation1 [shape = 'u32[144,128]{1,0:T(1,128)}', space=vmem, size = 0x12000, scoped, tag = 'internal scratch']
  %s0 = inlined_call_operand.vmem [shape: f32[8,126], index: 0, kind: input, shape index: {}]
  %s1 = inlined_call_operand.vmem [shape: bf16[126,144], index: 1, kind: input, shape index: {}]
  %s2 = inlined_call_operand.vmem [shape: f32[1,144], index: 2, kind: input, shape index: {}]
  %s3 = inlined_call_operand.vmem [shape: bf16[144,128], index: 3, kind: input, shape index: {}]
  %s4 = inlined_call_operand.vmem [shape: f32[1,128], index: 4, kind: input, shape index: {}]
  %s5 = inlined_call_operand.vmem [shape: bf16[128,128], index: 5, kind: input, shape index: {}]
  %s6 = inlined_call_operand.vmem [shape: f32[1,128], index: 6, kind: input, shape index: {}]
  %s7 = inlined_call_operand.vmem [shape: bf16[128,7], index: 7, kind: input, shape index: {}]
  %s8 = inlined_call_operand.vmem [shape: f32[1,7], index: 8, kind: input, shape index: {}]
  %s9 = inlined_call_operand.hbm [shape: f32[8,7], index: 9, kind: output, shape index: {}]
  %s10 = sld [smem:[#allocation0]]
  $region46: #{tpu_custom_call.1} parent=0
    _
  %s12 = ssub.s32 1, %s10
  %s13 = scalar_select 0, %s12, %s10
  $region1: #{tpu_custom_call.1} parent=0
    #allocation2 [shape = 'u8[4096]{0}', space=vmem, size = 0x1000, scoped, tag = 'output window, operand 0, single buffered']
    #allocation3 [shape = 's32[1]{0}', space=sflag, size = 0x4, scoped, tag = 'scoped memory for tpu_custom_call.1']
    %14 = vsyncpa [#allocation3], 0
    // Predicated region
    $region2: #{tpu_custom_call.1} parent=1 // pred_check
      _
    $region3: #{tpu_custom_call.1} parent=1 // pred_check_branch
      %16 = sbr.rel (0) target = $region5
    $region4: #{tpu_custom_call.1} parent=1 // pred_region
      _
    $region5: #{tpu_custom_call.1} parent=1 // pred_fallthru
      _
    // Predicated region
    $region6: #{tpu_custom_call.1} parent=1 // pred_check
      _
    $region7: #{tpu_custom_call.1} parent=1 // pred_check_branch
      %18 = sbr.rel (0) target = $region9
    $region8: #{tpu_custom_call.1} parent=1 // pred_region
      _
    $region9: #{tpu_custom_call.1} parent=1 // pred_fallthru
      _
    // Predicated region
    $region10: #{tpu_custom_call.1} parent=1 // pred_check
      _
    $region11: #{tpu_custom_call.1} parent=1 // pred_check_branch
      %20 = sbr.rel (0) target = $region13
    $region12: #{tpu_custom_call.1} parent=1 // pred_region
      _
    $region13: #{tpu_custom_call.1} parent=1 // pred_fallthru
      _
    // Predicated region
    $region14: #{tpu_custom_call.1} parent=1 // pred_check
      _
    $region15: #{tpu_custom_call.1} parent=1 // pred_check_branch
      %22 = sbr.rel (0) target = $region17
    $region16: #{tpu_custom_call.1} parent=1 // pred_region
      _
    $region17: #{tpu_custom_call.1} parent=1 // pred_fallthru
      _
    // Predicated region
    $region18: #{tpu_custom_call.1} parent=1 // pred_check
      _
    $region19: #{tpu_custom_call.1} parent=1 // pred_check_branch
      %24 = sbr.rel (0) target = $region21
    $region20: #{tpu_custom_call.1} parent=1 // pred_region
      _
    $region21: #{tpu_custom_call.1} parent=1 // pred_fallthru
      _
    // Predicated region
    $region22: #{tpu_custom_call.1} parent=1 // pred_check
      _
    $region23: #{tpu_custom_call.1} parent=1 // pred_check_branch
      %26 = sbr.rel (0) target = $region25
    $region24: #{tpu_custom_call.1} parent=1 // pred_region
      _
    $region25: #{tpu_custom_call.1} parent=1 // pred_fallthru
      _
    // Predicated region
    $region26: #{tpu_custom_call.1} parent=1 // pred_check
      _
    $region27: #{tpu_custom_call.1} parent=1 // pred_check_branch
      %28 = sbr.rel (0) target = $region29
    $region28: #{tpu_custom_call.1} parent=1 // pred_region
      _
    $region29: #{tpu_custom_call.1} parent=1 // pred_fallthru
      _
    // Predicated region
    $region30: #{tpu_custom_call.1} parent=1 // pred_check
      _
    $region31: #{tpu_custom_call.1} parent=1 // pred_check_branch
      %30 = sbr.rel (0) target = $region33
    $region32: #{tpu_custom_call.1} parent=1 // pred_region
      _
    $region33: #{tpu_custom_call.1} parent=1 // pred_fallthru
      _
    // Predicated region
    $region34: #{tpu_custom_call.1} parent=1 // pred_check
      _
    $region35: #{tpu_custom_call.1} parent=1 // pred_check_branch
      %32 = sbr.rel (0) target = $region37
    $region36: #{tpu_custom_call.1} parent=1 // pred_region
      _
    $region37: #{tpu_custom_call.1} parent=1 // pred_fallthru
      _
    %v34 = vld [vmem:[%s0] sm:$0xff]
    %v35 = vpack.c.bf16 %v34, %v34
    %v36 = vld [vmem:[%s1] sm:$0xff]
    %v37 = vld [vmem:[%s1 + $0x8] sm:$0xff]
    %v38 = vld [vmem:[%s1 + $0x10] sm:$0xff]
    %v39 = vld [vmem:[%s1 + $0x18] sm:$0xff]
    %v40 = vld [vmem:[%s1 + $0x20] sm:$0xff]
    %v41 = vld [vmem:[%s1 + $0x28] sm:$0xff]
    %v42 = vld [vmem:[%s1 + $0x30] sm:$0xff]
    %v43 = vld [vmem:[%s1 + $0x38] sm:$0xff]
    %v44 = vld [vmem:[%s1 + $0x40] sm:$0xff]
    %v45 = vld [vmem:[%s1 + $0x48] sm:$0xff]
    %v46 = vld [vmem:[%s1 + $0x50] sm:$0xff]
    %v47 = vld [vmem:[%s1 + $0x58] sm:$0xff]
    %v48 = vld [vmem:[%s1 + $0x60] sm:$0xff]
    %v49 = vld [vmem:[%s1 + $0x68] sm:$0xff]
    %v50 = vld [vmem:[%s1 + $0x70] sm:$0xff]
    %v51 = vld [vmem:[%s1 + $0x78] sm:$0x77]
    %v52 = vld [vmem:[%s2] sm:$0x3]
    %v54 = vlaneseq
    %v55 = vshrl.u32 %v54, 7
    %v56 = vsub.s32 0, %v55
    %v57 = vrot.slane %v52, %v56
    %v58 = vlaneseq
    %v59 = vshrl.u32 %v58, 7
    %v60 = vsub.s32 1, %v59
    %v61 = vrot.slane %v52, %v60
    %v80 = vunpack.c.l.b16 %v36
    %v81 = vunpack.c.h.b16 %v36
    %v82 = vunpack.c.l.b16 %v37
    %v83 = vunpack.c.h.b16 %v37
    %v84 = vunpack.c.l.b16 %v38
    %v85 = vunpack.c.h.b16 %v38
    %v86 = vunpack.c.l.b16 %v39
    %v87 = vunpack.c.h.b16 %v39
    %v88 = vunpack.c.l.b16 %v40
    %v89 = vunpack.c.h.b16 %v40
    %v90 = vunpack.c.l.b16 %v41
    %v91 = vunpack.c.h.b16 %v41
    %v92 = vunpack.c.l.b16 %v42
    %v93 = vunpack.c.h.b16 %v42
    %v94 = vunpack.c.l.b16 %v43
    %v95 = vunpack.c.h.b16 %v43
    %v96 = vunpack.c.l.b16 %v44
    %v97 = vunpack.c.h.b16 %v44
    %v98 = vunpack.c.l.b16 %v45
    %v99 = vunpack.c.h.b16 %v45
    %v100 = vunpack.c.l.b16 %v46
    %v101 = vunpack.c.h.b16 %v46
    %v102 = vunpack.c.l.b16 %v47
    %v103 = vunpack.c.h.b16 %v47
    %v104 = vunpack.c.l.b16 %v48
    %v105 = vunpack.c.h.b16 %v48
    %v106 = vunpack.c.l.b16 %v49
    %v107 = vunpack.c.h.b16 %v49
    %v108 = vunpack.c.l.b16 %v50
    %v109 = vunpack.c.h.b16 %v50
    %v110 = vunpack.c.l.b16 %v51
    %v111 = vunpack.c.h.b16 %v51
    %v112 = vpack.c.b16 %v82, %v80
    %v113 = vpack.c.b16 %v83, %v81
    %v114 = vpack.c.b16 %v86, %v84
    %v115 = vpack.c.b16 %v87, %v85
    %v116 = vpack.c.b16 %v90, %v88
    %v117 = vpack.c.b16 %v91, %v89
    %v118 = vpack.c.b16 %v94, %v92
    %v119 = vpack.c.b16 %v95, %v93
    %v120 = vpack.c.b16 %v98, %v96
    %v121 = vpack.c.b16 %v99, %v97
    %v122 = vpack.c.b16 %v102, %v100
    %v123 = vpack.c.b16 %v103, %v101
    %v124 = vpack.c.b16 %v106, %v104
    %v125 = vpack.c.b16 %v107, %v105
    %v126 = vpack.c.b16 %v110, %v108
    %v127 = vpack.c.b16 %v111, %v109
    %vm142 = vcmask 1031168
    %v144 = vsel %vm142, %v35, 0
    %vm146 = vcmask 1046528
    %v148 = vsel %vm146, %v126, 0
    %v151 = vsel %vm146, %v127, 0
    %153 = vmatprep.subr.bf16.mxu0 %v113
    %154 = vmatpush1.bf16.msra.mxu0 %v112
    %155 = vmatprep.subr.bf16.mxu0 %v115
    %156 = vmatpush1.bf16.msra.mxu0 %v114
    %157 = vmatprep.subr.bf16.mxu0 %v117
    %158 = vmatpush1.bf16.msra.mxu0 %v116
    %159 = vmatprep.subr.bf16.mxu0 %v119
    %160 = vmatpush1.bf16.msra.mxu0 %v118
    %161 = vmatprep.subr.bf16.mxu0 %v121
    %162 = vmatpush1.bf16.msra.mxu0 %v120
    %163 = vmatprep.subr.bf16.mxu0 %v123
    %164 = vmatpush1.bf16.msra.mxu0 %v122
    %165 = vmatprep.subr.bf16.mxu0 %v125
    %166 = vmatpush1.bf16.msra.mxu0 %v124
    %167 = vmatprep.subr.bf16.mxu0 %v151
    %168 = vmatpush1.bf16.msra.mxu0 %v148
    %169 = vmatprep.subr.bf16.mxu0 0
    %170 = vmatpush1.bf16.msra.mxu0 0
    %171 = vmatprep.subr.bf16.mxu0 0
    %172 = vmatpush1.bf16.msra.mxu0 0
    %173 = vmatprep.subr.bf16.mxu0 0
    %174 = vmatpush1.bf16.msra.mxu0 0
    %175 = vmatprep.subr.bf16.mxu0 0
    %176 = vmatpush1.bf16.msra.mxu0 0
    %177 = vmatprep.subr.bf16.mxu0 0
    %178 = vmatpush1.bf16.msra.mxu0 0
    %179 = vmatprep.subr.bf16.mxu0 0
    %180 = vmatpush1.bf16.msra.mxu0 0
    %181 = vmatprep.subr.bf16.mxu0 0
    %182 = vmatpush1.bf16.msra.mxu0 0
    %183 = vmatprep.subr.bf16.mxu0 0
    %184 = vmatpush1.bf16.msra.mxu0 0
    %185 = vmatprep.mubr.bf16.mxu0 0
    %186 = vmatmul.mubr.bf16.gmra.mrb[0].mxu0 %v144
    %v187 = vpop.f32.mrb[0].mxu0
    %v188 = vadd.f32 %v57, %v187
    %v189 = vpop.f32.mrb[0].mxu0
    %v190 = vadd.f32 %v61, %v189
    %v191 = vpop.f32.mrb[0].mxu0
    %v192 = vpop.f32.mrb[0].mxu0
    %193 = vdwg.mxu0
    %v194 = vmax.f32 %v188, 0.0
    %v195 = vmax.f32 %v190, 0.0
    %v196 = vpack.c.bf16 %v194, %v194
    %v197 = vpack.c.bf16 %v195, %v195
    %v198 = vld [vmem:[%s3] sm:$0xf]
    %v199 = vld [vmem:[%s3 + $0x4] sm:$0xf]
    %v200 = vld [vmem:[%s3 + $0x8] sm:$0xf]
    %v201 = vld [vmem:[%s3 + $0xc] sm:$0xf]
    %v202 = vld [vmem:[%s3 + $0x10] sm:$0xf]
    %v203 = vld [vmem:[%s3 + $0x14] sm:$0xf]
    %v204 = vld [vmem:[%s3 + $0x18] sm:$0xf]
    %v205 = vld [vmem:[%s3 + $0x1c] sm:$0xf]
    %v206 = vld [vmem:[%s3 + $0x20] sm:$0xf]
    %v207 = vld [vmem:[%s3 + $0x24] sm:$0xf]
    %v208 = vld [vmem:[%s3 + $0x28] sm:$0xf]
    %v209 = vld [vmem:[%s3 + $0x2c] sm:$0xf]
    %v210 = vld [vmem:[%s3 + $0x30] sm:$0xf]
    %v211 = vld [vmem:[%s3 + $0x34] sm:$0xf]
    %v212 = vld [vmem:[%s3 + $0x38] sm:$0xf]
    %v213 = vld [vmem:[%s3 + $0x3c] sm:$0xf]
    %v214 = vld [vmem:[%s3 + $0x40] sm:$0xf]
    %v215 = vld [vmem:[%s3 + $0x44] sm:$0xf]
    %v216 = vld [vmem:[%s4] sm:$0x1]
    %v218 = vlaneseq
    %v219 = vshrl.u32 %v218, 7
    %v220 = vsub.s32 0, %v219
    %v221 = vrot.slane %v216, %v220
    %v241 = vunpack.c.l.b16 %v198
    %v242 = vunpack.c.l.b16 %v199
    %v243 = vunpack.c.l.b16 %v200
    %v244 = vunpack.c.l.b16 %v201
    %v245 = vunpack.c.l.b16 %v202
    %v246 = vunpack.c.l.b16 %v203
    %v247 = vunpack.c.l.b16 %v204
    %v248 = vunpack.c.l.b16 %v205
    %v249 = vunpack.c.l.b16 %v206
    %v250 = vunpack.c.l.b16 %v207
    %v251 = vunpack.c.l.b16 %v208
    %v252 = vunpack.c.l.b16 %v209
    %v253 = vunpack.c.l.b16 %v210
    %v254 = vunpack.c.l.b16 %v211
    %v255 = vunpack.c.l.b16 %v212
    %v256 = vunpack.c.l.b16 %v213
    %v257 = vunpack.c.l.b16 %v214
    %v258 = vunpack.c.l.b16 %v215
    %v259 = vpack.c.b16 %v242, %v241
    %v260 = vpack.c.b16 %v244, %v243
    %v261 = vpack.c.b16 %v246, %v245
    %v262 = vpack.c.b16 %v248, %v247
    %v263 = vpack.c.b16 %v250, %v249
    %v264 = vpack.c.b16 %v252, %v251
    %v265 = vpack.c.b16 %v254, %v253
    %v266 = vpack.c.b16 %v256, %v255
    %v267 = vpack.c.b16 %v258, %v257
    %vm277 = vcmask 130048
    %v279 = vsel %vm277, %v197, 0
    %281 = vmatprep.subr.bf16.mxu0 0
    %282 = vmatpush1.bf16.msra.mxu0 %v259
    %283 = vmatprep.subr.bf16.mxu0 0
    %284 = vmatpush1.bf16.msra.mxu0 %v260
    %285 = vmatprep.subr.bf16.mxu0 0
    %286 = vmatpush1.bf16.msra.mxu0 %v261
    %287 = vmatprep.subr.bf16.mxu0 0
    %288 = vmatpush1.bf16.msra.mxu0 %v262
    %289 = vmatprep.subr.bf16.mxu0 0
    %290 = vmatpush1.bf16.msra.mxu0 %v263
    %291 = vmatprep.subr.bf16.mxu0 0
    %292 = vmatpush1.bf16.msra.mxu0 %v264
    %293 = vmatprep.subr.bf16.mxu0 0
    %294 = vmatpush1.bf16.msra.mxu0 %v265
    %295 = vmatprep.subr.bf16.mxu0 0
    %296 = vmatpush1.bf16.msra.mxu0 %v266
    %297 = vmatprep.subr.bf16.mxu0 0
    %298 = vmatpush1.bf16.msra.mxu0 %v267
    %299 = vmatprep.subr.bf16.mxu0 0
    %300 = vmatpush1.bf16.msra.mxu0 0
    %301 = vmatprep.subr.bf16.mxu0 0
    %302 = vmatpush1.bf16.msra.mxu0 0
    %303 = vmatprep.subr.bf16.mxu0 0
    %304 = vmatpush1.bf16.msra.mxu0 0
    %305 = vmatprep.subr.bf16.mxu0 0
    %306 = vmatpush1.bf16.msra.mxu0 0
    %307 = vmatprep.subr.bf16.mxu0 0
    %308 = vmatpush1.bf16.msra.mxu0 0
    %309 = vmatprep.subr.bf16.mxu0 0
    %310 = vmatpush1.bf16.msra.mxu0 0
    %311 = vmatprep.subr.bf16.mxu0 0
    %312 = vmatpush1.bf16.msra.mxu0 0
    %313 = vmatprep.mubr.bf16.mxu0 %v279
    %314 = vmatmul.mubr.bf16.gmra.mrb[0].mxu0 %v196
    %v315 = vpop.f32.mrb[0].mxu0
    %v316 = vadd.f32 %v221, %v315
    %v317 = vpop.f32.mrb[0].mxu0
    %v318 = vpop.f32.mrb[0].mxu0
    %v319 = vpop.f32.mrb[0].mxu0
    %320 = vdwg.mxu0
    %v321 = vmax.f32 %v316, 0.0
    %v322 = vpack.c.bf16 %v321, %v321
    %v323 = vld [vmem:[%s5] sm:$0xf]
    %v324 = vld [vmem:[%s5 + $0x4] sm:$0xf]
    %v325 = vld [vmem:[%s5 + $0x8] sm:$0xf]
    %v326 = vld [vmem:[%s5 + $0xc] sm:$0xf]
    %v327 = vld [vmem:[%s5 + $0x10] sm:$0xf]
    %v328 = vld [vmem:[%s5 + $0x14] sm:$0xf]
    %v329 = vld [vmem:[%s5 + $0x18] sm:$0xf]
    %v330 = vld [vmem:[%s5 + $0x1c] sm:$0xf]
    %v331 = vld [vmem:[%s5 + $0x20] sm:$0xf]
    %v332 = vld [vmem:[%s5 + $0x24] sm:$0xf]
    %v333 = vld [vmem:[%s5 + $0x28] sm:$0xf]
    %v334 = vld [vmem:[%s5 + $0x2c] sm:$0xf]
    %v335 = vld [vmem:[%s5 + $0x30] sm:$0xf]
    %v336 = vld [vmem:[%s5 + $0x34] sm:$0xf]
    %v337 = vld [vmem:[%s5 + $0x38] sm:$0xf]
    %v338 = vld [vmem:[%s5 + $0x3c] sm:$0xf]
    %v339 = vld [vmem:[%s6] sm:$0x1]
    %v341 = vlaneseq
    %v342 = vshrl.u32 %v341, 7
    %v343 = vsub.s32 0, %v342
    %v344 = vrot.slane %v339, %v343
    %v362 = vunpack.c.l.b16 %v323
    %v363 = vunpack.c.l.b16 %v324
    %v364 = vunpack.c.l.b16 %v325
    %v365 = vunpack.c.l.b16 %v326
    %v366 = vunpack.c.l.b16 %v327
    %v367 = vunpack.c.l.b16 %v328
    %v368 = vunpack.c.l.b16 %v329
    %v369 = vunpack.c.l.b16 %v330
    %v370 = vunpack.c.l.b16 %v331
    %v371 = vunpack.c.l.b16 %v332
    %v372 = vunpack.c.l.b16 %v333
    %v373 = vunpack.c.l.b16 %v334
    %v374 = vunpack.c.l.b16 %v335
    %v375 = vunpack.c.l.b16 %v336
    %v376 = vunpack.c.l.b16 %v337
    %v377 = vunpack.c.l.b16 %v338
    %v378 = vpack.c.b16 %v363, %v362
    %v379 = vpack.c.b16 %v365, %v364
    %v380 = vpack.c.b16 %v367, %v366
    %v381 = vpack.c.b16 %v369, %v368
    %v382 = vpack.c.b16 %v371, %v370
    %v383 = vpack.c.b16 %v373, %v372
    %v384 = vpack.c.b16 %v375, %v374
    %v385 = vpack.c.b16 %v377, %v376
    %394 = vmatprep.subr.bf16.mxu0 0
    %395 = vmatpush1.bf16.msra.mxu0 %v378
    %396 = vmatprep.subr.bf16.mxu0 0
    %397 = vmatpush1.bf16.msra.mxu0 %v379
    %398 = vmatprep.subr.bf16.mxu0 0
    %399 = vmatpush1.bf16.msra.mxu0 %v380
    %400 = vmatprep.subr.bf16.mxu0 0
    %401 = vmatpush1.bf16.msra.mxu0 %v381
    %402 = vmatprep.subr.bf16.mxu0 0
    %403 = vmatpush1.bf16.msra.mxu0 %v382
    %404 = vmatprep.subr.bf16.mxu0 0
    %405 = vmatpush1.bf16.msra.mxu0 %v383
    %406 = vmatprep.subr.bf16.mxu0 0
    %407 = vmatpush1.bf16.msra.mxu0 %v384
    %408 = vmatprep.subr.bf16.mxu0 0
    %409 = vmatpush1.bf16.msra.mxu0 %v385
    %410 = vmatprep.subr.bf16.mxu0 0
    %411 = vmatpush1.bf16.msra.mxu0 0
    %412 = vmatprep.subr.bf16.mxu0 0
    %413 = vmatpush1.bf16.msra.mxu0 0
    %414 = vmatprep.subr.bf16.mxu0 0
    %415 = vmatpush1.bf16.msra.mxu0 0
    %416 = vmatprep.subr.bf16.mxu0 0
    %417 = vmatpush1.bf16.msra.mxu0 0
    %418 = vmatprep.subr.bf16.mxu0 0
    %419 = vmatpush1.bf16.msra.mxu0 0
    %420 = vmatprep.subr.bf16.mxu0 0
    %421 = vmatpush1.bf16.msra.mxu0 0
    %422 = vmatprep.subr.bf16.mxu0 0
    %423 = vmatpush1.bf16.msra.mxu0 0
    %424 = vmatprep.subr.bf16.mxu0 0
    %425 = vmatpush1.bf16.msra.mxu0 0
    %426 = vmatprep.mubr.bf16.mxu0 0
    %427 = vmatmul.mubr.bf16.gmra.mrb[0].mxu0 %v322
    %v428 = vpop.f32.mrb[0].mxu0
    %v429 = vadd.f32 %v344, %v428
    %v430 = vpop.f32.mrb[0].mxu0
    %v431 = vpop.f32.mrb[0].mxu0
    %v432 = vpop.f32.mrb[0].mxu0
    %433 = vdwg.mxu0
    %v434 = vmax.f32 %v429, 0.0
    %v435 = vpack.c.bf16 %v434, %v434
    %v436 = vld [vmem:[%s7] sm:$0xf]
    %v437 = vld [vmem:[%s7 + $0x4] sm:$0xf]
    %v438 = vld [vmem:[%s7 + $0x8] sm:$0xf]
    %v439 = vld [vmem:[%s7 + $0xc] sm:$0xf]
    %v440 = vld [vmem:[%s7 + $0x10] sm:$0xf]
    %v441 = vld [vmem:[%s7 + $0x14] sm:$0xf]
    %v442 = vld [vmem:[%s7 + $0x18] sm:$0xf]
    %v443 = vld [vmem:[%s7 + $0x1c] sm:$0xf]
    %v444 = vld [vmem:[%s7 + $0x20] sm:$0xf]
    %v445 = vld [vmem:[%s7 + $0x24] sm:$0xf]
    %v446 = vld [vmem:[%s7 + $0x28] sm:$0xf]
    %v447 = vld [vmem:[%s7 + $0x2c] sm:$0xf]
    %v448 = vld [vmem:[%s7 + $0x30] sm:$0xf]
    %v449 = vld [vmem:[%s7 + $0x34] sm:$0xf]
    %v450 = vld [vmem:[%s7 + $0x38] sm:$0xf]
    %v451 = vld [vmem:[%s7 + $0x3c] sm:$0xf]
    %v452 = vld [vmem:[%s8] sm:$0x1]
    %v454 = vlaneseq
    %v455 = vshrl.u32 %v454, 7
    %v456 = vsub.s32 0, %v455
    %v457 = vrot.slane %v452, %v456
    %v475 = vunpack.c.l.b16 %v436
    %v476 = vunpack.c.l.b16 %v437
    %v477 = vunpack.c.l.b16 %v438
    %v478 = vunpack.c.l.b16 %v439
    %v479 = vunpack.c.l.b16 %v440
    %v480 = vunpack.c.l.b16 %v441
    %v481 = vunpack.c.l.b16 %v442
    %v482 = vunpack.c.l.b16 %v443
    %v483 = vunpack.c.l.b16 %v444
    %v484 = vunpack.c.l.b16 %v445
    %v485 = vunpack.c.l.b16 %v446
    %v486 = vunpack.c.l.b16 %v447
    %v487 = vunpack.c.l.b16 %v448
    %v488 = vunpack.c.l.b16 %v449
    %v489 = vunpack.c.l.b16 %v450
    %v490 = vunpack.c.l.b16 %v451
    %v491 = vpack.c.b16 %v476, %v475
    %v492 = vpack.c.b16 %v478, %v477
    %v493 = vpack.c.b16 %v480, %v479
    %v494 = vpack.c.b16 %v482, %v481
    %v495 = vpack.c.b16 %v484, %v483
    %v496 = vpack.c.b16 %v486, %v485
    %v497 = vpack.c.b16 %v488, %v487
    %v498 = vpack.c.b16 %v490, %v489
    %507 = vmatprep.subr.bf16.mxu0 0
    %508 = vmatpush1.bf16.msra.mxu0 %v491
    %509 = vmatprep.subr.bf16.mxu0 0
    %510 = vmatpush1.bf16.msra.mxu0 %v492
    %511 = vmatprep.subr.bf16.mxu0 0
    %512 = vmatpush1.bf16.msra.mxu0 %v493
    %513 = vmatprep.subr.bf16.mxu0 0
    %514 = vmatpush1.bf16.msra.mxu0 %v494
    %515 = vmatprep.subr.bf16.mxu0 0
    %516 = vmatpush1.bf16.msra.mxu0 %v495
    %517 = vmatprep.subr.bf16.mxu0 0
    %518 = vmatpush1.bf16.msra.mxu0 %v496
    %519 = vmatprep.subr.bf16.mxu0 0
    %520 = vmatpush1.bf16.msra.mxu0 %v497
    %521 = vmatprep.subr.bf16.mxu0 0
    %522 = vmatpush1.bf16.msra.mxu0 %v498
    %523 = vmatprep.subr.bf16.mxu0 0
    %524 = vmatpush1.bf16.msra.mxu0 0
    %525 = vmatprep.subr.bf16.mxu0 0
    %526 = vmatpush1.bf16.msra.mxu0 0
    %527 = vmatprep.subr.bf16.mxu0 0
    %528 = vmatpush1.bf16.msra.mxu0 0
    %529 = vmatprep.subr.bf16.mxu0 0
    %530 = vmatpush1.bf16.msra.mxu0 0
    %531 = vmatprep.subr.bf16.mxu0 0
    %532 = vmatpush1.bf16.msra.mxu0 0
    %533 = vmatprep.subr.bf16.mxu0 0
    %534 = vmatpush1.bf16.msra.mxu0 0
    %535 = vmatprep.subr.bf16.mxu0 0
    %536 = vmatpush1.bf16.msra.mxu0 0
    %537 = vmatprep.subr.bf16.mxu0 0
    %538 = vmatpush1.bf16.msra.mxu0 0
    %539 = vmatprep.mubr.bf16.mxu0 0
    %540 = vmatmul.mubr.bf16.gmra.mrb[0].mxu0 %v435
    %v541 = vpop.f32.mrb[0].mxu0
    %v542 = vadd.f32 %v457, %v541
    %v543 = vpop.f32.mrb[0].mxu0
    %v544 = vpop.f32.mrb[0].mxu0
    %v545 = vpop.f32.mrb[0].mxu0
    %546 = vdwg.mxu0
    %v547 = vsub.f32 0.0, %v542
    %v548 = vmul.f32 %v547, 1.442695
    %v549 = vpow.pop %v548
    %v550 = vadd.f32 %v549, 1.0
    %v551 = vrcp.pop %v550
    %vm552 = vcmask 56320
    %553 = vst.msk [vmem:[#allocation2] sm:$0xff] %vm552, %v551
    // Predicated region
    $region38: #{tpu_custom_call.1} parent=1 // pred_check
      _
    $region39: #{tpu_custom_call.1} parent=1 // pred_check_branch
      %555 = sbr.rel (0) target = $region41
    $region40: #{tpu_custom_call.1} parent=1 // pred_region
      %s557 = ssub.s32 128, 128
      %558 = vsyncadd [#allocation3], %s557
      %s560 = sshll.u32 [#allocation2], 4
      %s561 = int_to_ptr.vmem [resolvable:$true] %s560
      %563 = dma.vmem_to_hbm [thread:$0]  %s561, 128, %s9, [#allocation3]
    $region41: #{tpu_custom_call.1} parent=1 // pred_fallthru
      _
    // Predicated region
    $region42: #{tpu_custom_call.1} parent=1 // pred_check
      _
    $region43: #{tpu_custom_call.1} parent=1 // pred_check_branch
      %565 = sbr.rel (0) target = $region45
    $region44: #{tpu_custom_call.1} parent=1 // pred_region
      %566 = dma.done [#allocation3], 128
    $region45: #{tpu_custom_call.1} parent=1 // pred_fallthru
      _
    %567 = vsyncpa [#allocation3], 1

</llo_original>
